<compile_context>
chip_gen: v7x
topology: tpu7x:2x2x1
jax: 0.10.0
libtpu: 0.0.40
codegen_flags: <defaults>
</compile_context>

<pallas_src>
import math
import jax
import jax.numpy as jnp
from jax.experimental import pallas as pl
from jax.experimental.pallas import tpu as pltpu

_ITEM = 4  # f32 bytes


# ---------------------------------------------------------------------------
# helpers
# ---------------------------------------------------------------------------
def _round_up(a, b):
    return ((a + b - 1) // b) * b


def _pick_tile(n, candidates):
    """Largest candidate that divides n; otherwise the full extent."""
    for c in candidates:
        if c <= n and n % c == 0:
            return c
    return n


def _largest_divisor_tile(n, max_tile):
    """Largest multiple-of-8 divisor of n (n % 8 == 0) that is <= max_tile."""
    best = min(n, 8)
    t = 8
    limit = min(n, max_tile)
    while t <= limit:
        if n % t == 0:
            best = t
        t += 8
    return best


def _vmem_budget():
    """Usable VMEM bytes, leaving ~25% headroom for Mosaic internal scratch."""
    try:
        cap = pltpu.get_tpu_info().vmem_capacity_bytes
    except Exception:
        cap = 64 * 1024 * 1024  # conservative fallback: v7x per-TC VMEM
    return int(cap) * 3 // 4


# ---------------------------------------------------------------------------
# kernels
# ---------------------------------------------------------------------------
def _linear_kernel(x_ref, w_ref, b_ref, o_ref):
    # Single-K-step: x (tm, K) @ w (K, tn) + b (1, tn) -> o (tm, tn).
    # No accumulator scratch, no pl.when branches, no K grid axis.
    o_ref[...] = (
        jnp.dot(x_ref[...], w_ref[...], preferred_element_type=jnp.float32)
        + b_ref[...].astype(jnp.float32)
    ).astype(o_ref.dtype)


def _linear_kernel_ktiled(x_ref, w_ref, b_ref, o_ref, acc_ref):
    # K-tiled path with f32 accumulator; the last partial product is fused
    # with the output store (never round-trips through acc_ref).
    k = pl.program_id(2)
    nk = pl.num_programs(2)

    @pl.when(k == 0)
    def _():
        acc_ref[...] = jnp.zeros_like(acc_ref)

    part = jnp.dot(x_ref[...], w_ref[...], preferred_element_type=jnp.float32)

    @pl.when(k < nk - 1)
    def _():
        acc_ref[...] += part

    @pl.when(k == nk - 1)
    def _():
        o_ref[...] = (
            acc_ref[...] + part + b_ref[...].astype(jnp.float32)
        ).astype(o_ref.dtype)


# ---------------------------------------------------------------------------
# wrapper
# ---------------------------------------------------------------------------
def linear_forward(x, weight, bias=None):
    """Pallas equivalent of `x @ weight (+ bias)` for a (dim, dim) weight."""
    orig_shape = x.shape
    K, N = weight.shape
    assert x.shape[-1] == K, "feature axis of x must match weight's first axis"

    x2d = x.reshape(-1, K).astype(jnp.float32)
    weight = weight.astype(jnp.float32)
    M = x2d.shape[0]
    out_dtype = x.dtype

    # Bias always present (zeros if None) so one kernel body covers both cases.
    b2d = (bias if bias is not None else jnp.zeros((N,), jnp.float32))
    b2d = b2d.astype(jnp.float32).reshape(1, N)

    # Pad rows only up to the 8-sublane granule (tiny copy; no 256-row pad).
    M_pad = _round_up(M, 8)
    if M_pad != M:
        x2d = jnp.pad(x2d, ((0, M_pad - M), (0, 0)))

    budget = _vmem_budget()
    flops = 2 * M_pad * K * N

    # ---------------- Path A: weight fully VMEM-resident ----------------
    if K * N * _ITEM <= budget // 4:
        tm_max = 1024
        while tm_max > 8 and (
            2 * tm_max * (K + N) * _ITEM + 2 * (K * N + N) * _ITEM > budget
        ):
            tm_max //= 2
        tm = _largest_divisor_tile(M_pad, tm_max)
        # Guarantee >= 2 parallel tiles so both v7x TensorCores get work.
        if M_pad // tm == 1 and tm % 16 == 0:
            tm //= 2
        grid = (M_pad // tm,)

        fp = 2 * (tm * K + tm * N + K * N + N) * _ITEM
        bytes_accessed = (M_pad * K + K * N + M_pad * N + N) * _ITEM

        out = pl.pallas_call(
            _linear_kernel,
            out_shape=jax.ShapeDtypeStruct((M_pad, N), out_dtype),
            grid_spec=pltpu.PrefetchScalarGridSpec(
                num_scalar_prefetch=0,
                grid=grid,
                in_specs=[
                    pl.BlockSpec((tm, K), lambda i: (i, 0)),
                    pl.BlockSpec((K, N), lambda i: (0, 0)),  # resident weight
                    pl.BlockSpec((1, N), lambda i: (0, 0)),  # resident bias
                ],
                out_specs=pl.BlockSpec((tm, N), lambda i: (i, 0)),
            ),
            compiler_params=pltpu.CompilerParams(
                dimension_semantics=("parallel",),
                vmem_limit_bytes=int(
                    min(budget, max(32 * 1024 * 1024, fp + (4 << 20)))
                ),
            ),
            cost_estimate=pl.CostEstimate(
                flops=flops, bytes_accessed=bytes_accessed, transcendentals=0
            ),
        )(x2d, weight, b2d)

    else:
        tn = _pick_tile(N, (512, 256, 128))
        tm = _largest_divisor_tile(M_pad, 512)

        def _fp_single(tm_, tn_):
            return 2 * (tm_ * K + K * tn_ + tm_ * tn_ + tn_) * _ITEM

        # -------------- Path B: single K step (no accumulator) --------------
        if _fp_single(tm, tn) <= budget:
            if (M_pad // tm) * (N // tn) == 1:
                if tm % 16 == 0:
                    tm //= 2
                elif tn % 256 == 0:
                    tn //= 2
            grid = (M_pad // tm, N // tn)
            fp = _fp_single(tm, tn)
            bytes_accessed = (
                M_pad * K * (N // tn) + K * N * (M_pad // tm) + M_pad * N + N
            ) * _ITEM

            out = pl.pallas_call(
                _linear_kernel,
                out_shape=jax.ShapeDtypeStruct((M_pad, N), out_dtype),
                grid_spec=pltpu.PrefetchScalarGridSpec(
                    num_scalar_prefetch=0,
                    grid=grid,
                    in_specs=[
                        pl.BlockSpec((tm, K), lambda i, j: (i, 0)),
                        pl.BlockSpec((K, tn), lambda i, j: (0, j)),
                        pl.BlockSpec((1, tn), lambda i, j: (0, j)),
                    ],
                    out_specs=pl.BlockSpec((tm, tn), lambda i, j: (i, j)),
                ),
                compiler_params=pltpu.CompilerParams(
                    dimension_semantics=("parallel", "parallel"),
                    vmem_limit_bytes=int(
                        min(budget, max(32 * 1024 * 1024, fp + (4 << 20)))
                    ),
                ),
                cost_estimate=pl.CostEstimate(
                    flops=flops, bytes_accessed=bytes_accessed, transcendentals=0
                ),
            )(x2d, weight, b2d)

        # -------------- Path C: K-tiled with f32 accumulator --------------
        else:
            tk = _pick_tile(K, (1024, 512, 256, 128))
            grid = (M_pad // tm, N // tn, K // tk)
            fp = (2 * (tm * tk + tk * tn + tm * tn + tn) + tm * tn) * _ITEM
            bytes_accessed = (
                M_pad * K * (N // tn) + K * N * (M_pad // tm) + M_pad * N + N
            ) * _ITEM

            out = pl.pallas_call(
                _linear_kernel_ktiled,
                out_shape=jax.ShapeDtypeStruct((M_pad, N), out_dtype),
                grid_spec=pltpu.PrefetchScalarGridSpec(
                    num_scalar_prefetch=0,
                    grid=grid,
                    in_specs=[
                        pl.BlockSpec((tm, tk), lambda i, j, k: (i, k)),
                        pl.BlockSpec((tk, tn), lambda i, j, k: (k, j)),
                        pl.BlockSpec((1, tn), lambda i, j, k: (0, j)),
                    ],
                    out_specs=pl.BlockSpec((tm, tn), lambda i, j, k: (i, j)),
                    scratch_shapes=[pltpu.VMEM((tm, tn), jnp.float32)],
                ),
                compiler_params=pltpu.CompilerParams(
                    dimension_semantics=("parallel", "parallel", "arbitrary"),
                    vmem_limit_bytes=int(
                        min(budget, max(32 * 1024 * 1024, fp + (4 << 20)))
                    ),
                ),
                cost_estimate=pl.CostEstimate(
                    flops=flops, bytes_accessed=bytes_accessed, transcendentals=0
                ),
            )(x2d, weight, b2d)

    if M_pad != M:
        out = out[:M]
    return out.reshape(orig_shape[:-1] + (N,))


class LinearLayerPallas:
    """Mirrors tests/n_diagonal/linear.py::LinearLayer (f32 params, f32 accumulate)."""

    def __init__(self, dim, bias=True, key=jax.random.PRNGKey(0)):
        self.dim = dim
        std = math.sqrt(2.0 / dim)
        kw, kb = jax.random.split(key)
        self.weight = jax.random.normal(kw, (dim, dim), jnp.float32) * std
        self.bias = jax.random.normal(kb, (dim,), jnp.float32) if bias else None

    def __call__(self, x):
        return linear_forward(x, self.weight, self.bias)


# ---------------------------------------------------------------------------
# self-test
# ---------------------------------------------------------------------------
if __name__ == "__main__":
    key = jax.random.PRNGKey(0)
    k_x, k_p, k_x2, k_p2 = jax.random.split(key, 4)

    # Primary: dim=128, M=2*16=32, bias=True -> weight-resident path, grid (2,)
    dim = 128
    x = jax.random.normal(k_x, (2, 16, dim), jnp.float32)
    layer = LinearLayerPallas(dim, bias=True, key=k_p)
    out = jax.block_until_ready(layer(x))
    ref = (
        jnp.einsum("bsd,dk->bsk", x, layer.weight,
                   precision=jax.lax.Precision.HIGHEST)
        + layer.bias
    )
    assert out.shape == ref.shape
    # Loose-ish tolerance: MXU matmul precision modes may differ slightly from
    # the HIGHEST-precision XLA reference; structural bugs would blow far past this.
    assert jnp.allclose(out, ref, atol=2e-2, rtol=2e-2), "bias path mismatch"

    # Secondary: dim=256, M=2*15=30 (pads to 32, sliced back), bias=False
    dim2 = 256
    x2 = jax.random.normal(k_x2, (2, 15, dim2), jnp.float32)
    layer2 = LinearLayerPallas(dim2, bias=False, key=k_p2)
    out2 = jax.block_until_ready(layer2(x2))
    ref2 = jnp.einsum("bsd,dk->bsk", x2, layer2.weight,
                      precision=jax.lax.Precision.HIGHEST)
    assert out2.shape == ref2.shape
    assert jnp.allclose(out2, ref2, atol=2e-2, rtol=2e-2), "no-bias path mismatch"

    print("KERNEL_OK")
</pallas_src>

<mosaic_0001>
module attributes {stable_mosaic.version = 11 : i64} {
  func.func @_linear_kernel(%arg0: i32, %arg1: memref<16x128xf32, #tpu.memory_space<vmem>>, %arg2: memref<128x128xf32, #tpu.memory_space<vmem>>, %arg3: memref<1x128xf32, #tpu.memory_space<vmem>>, %arg4: memref<16x128xf32, #tpu.memory_space<vmem>>) attributes {dimension_semantics = [#tpu.dimension_semantics<parallel>], iteration_bounds = array<i64: 2>, scalar_prefetch = 0 : i64, scratch_operands = 0 : i64, tpu.core_type = #tpu.core_type<tc>, window_params = [{transform_indices = @transform_0, window_bounds = array<i64: 16, 128>}, {pipeline_mode = #tpu.pipeline_mode<synchronous>, transform_indices = @transform_1, window_bounds = array<i64: 128, 128>}, {pipeline_mode = #tpu.pipeline_mode<synchronous>, transform_indices = @transform_2, window_bounds = array<i64: 1, 128>}, {transform_indices = @transform_3, window_bounds = array<i64: 16, 128>}]} {
    %c0 = arith.constant 0 : index
    %c0_0 = arith.constant 0 : index
    %0 = vector.load %arg1[%c0, %c0_0] : memref<16x128xf32, #tpu.memory_space<vmem>>, vector<16x128xf32>
    %c0_1 = arith.constant 0 : index
    %c0_2 = arith.constant 0 : index
    %1 = vector.load %arg2[%c0_1, %c0_2] : memref<128x128xf32, #tpu.memory_space<vmem>>, vector<128x128xf32>
    %cst = arith.constant dense<0.000000e+00> : vector<16x128xf32>
    %2 = tpu.matmul %0, %1, %cst {dimension_numbers = #tpu.dot_dimension_numbers<[1], [0], [0], [1], [0, 0, 1, 1], [], []>} : vector<16x128xf32>, vector<128x128xf32>, vector<16x128xf32> -> vector<16x128xf32>
    %c0_3 = arith.constant 0 : index
    %c0_4 = arith.constant 0 : index
    %3 = vector.load %arg3[%c0_3, %c0_4] : memref<1x128xf32, #tpu.memory_space<vmem>>, vector<1x128xf32>
    %4 = vector.broadcast %3 : vector<1x128xf32> to vector<16x128xf32>
    %5 = arith.addf %2, %4 : vector<16x128xf32>
    %c0_5 = arith.constant 0 : index
    %c0_6 = arith.constant 0 : index
    %6 = vector.load %arg4[%c0_5, %c0_6] : memref<16x128xf32, #tpu.memory_space<vmem>>, vector<16x128xf32>
    tpu.vector_store %arg4[%c0_5, %c0_6], %5 {strides = array<i32>} : memref<16x128xf32, #tpu.memory_space<vmem>>, vector<16x128xf32>,
    return
  }
  func.func @transform_0(%arg0: i32) -> (i32, i32) {
    %c0_i32 = arith.constant 0 : i32
    %c0_i32_0 = arith.constant 0 : i32
    return %arg0, %c0_i32 : i32, i32
  }
  func.func @transform_1(%arg0: i32) -> (i32, i32) {
    %c0_i32 = arith.constant 0 : i32
    %c0_i32_0 = arith.constant 0 : i32
    %c0_i32_1 = arith.constant 0 : i32
    return %c0_i32, %c0_i32_0 : i32, i32
  }
  func.func @transform_2(%arg0: i32) -> (i32, i32) {
    %c0_i32 = arith.constant 0 : i32
    %c0_i32_0 = arith.constant 0 : i32
    %c0_i32_1 = arith.constant 0 : i32
    return %c0_i32, %c0_i32_0 : i32, i32
  }
  func.func @transform_3(%arg0: i32) -> (i32, i32) {
    %c0_i32 = arith.constant 0 : i32
    %c0_i32_0 = arith.constant 0 : i32
    return %arg0, %c0_i32 : i32, i32
  }
}

</mosaic_0001>

<llo_original>
// kernel: tpu_custom_call.1
$region0: #{tpu_custom_call.1}
  #allocation0 [shape = 'u32[]', space=smem, size = 0x4, offset = 0x4, fixed_abs, tag = 'smem constant byte address 0x4 - core index']
  #allocation1 [shape = 'u32[144,128]{1,0:T(1,128)}', space=vmem, size = 0x12000, scoped, tag = 'internal scratch']
  %s0 = inlined_call_operand.hbm [shape: f32[32,128], index: 0, kind: input, shape index: {}]
  %s1 = inlined_call_operand.hbm [shape: f32[128,128], index: 1, kind: input, shape index: {}]
  %s2 = inlined_call_operand.vmem [shape: f32[1,128], index: 2, kind: input, shape index: {}]
  %s3 = inlined_call_operand.hbm [shape: f32[32,128], index: 3, kind: output, shape index: {}]
  %s4 = sld [smem:[#allocation0]]
  $region53: #{tpu_custom_call.1} parent=0
    _
  %s6 = ssub.s32 1, %s4
  %s7 = scalar_select 0, %s6, %s4
  $region1: #{tpu_custom_call.1} parent=0
    #allocation2 [shape = 'u8[16384]{0}', space=vmem, size = 0x4000, scoped, tag = 'input window, operand 0']
    #allocation3 [shape = 's32[2]{0}', space=sflag, size = 0x8, scoped, tag = 'scoped memory for tpu_custom_call.1']
    #allocation4 [shape = 's32[2]{0}', space=sflag, size = 0x8, scoped, tag = 'scoped memory for tpu_custom_call.1']
    #allocation5 [shape = 'u8[65536]{0}', space=vmem, size = 0x10000, scoped, tag = 'input window, operand 1, single buffered']
    #allocation6 [shape = 's32[1]{0}', space=sflag, size = 0x4, scoped, tag = 'scoped memory for tpu_custom_call.1']
    #allocation7 [shape = 'u8[16384]{0}', space=vmem, size = 0x4000, scoped, tag = 'output window, operand 0']
    %8 = vsyncpa [#allocation3], 0
    %s9 = scalar_lea.sflag [#allocation3], 1
    %10 = vsyncpa %s9, 0
    %11 = vsyncpa [#allocation6], 0
    %12 = vsyncpa [#allocation4], 0
    %s13 = scalar_lea.sflag [#allocation4], 1
    %14 = vsyncpa %s13, 0
    loop: start=0, step=1, limit=4
    $region2: #{tpu_custom_call.1} parent=1 // loop_pre_header
      _
    $region3: #{tpu_custom_call.1} parent=1 // loop_header
      %s16 = sphi 0, %s20
      %p17 = scmp.ge.s32.totalorder %s16, 4
      %s26 = sphi 0, %s28
      %s29 = sphi 0, %s26
      %s30 = sphi 0, %s29
      %s46 = sphi 0, %s30
      %s50 = sphi 0, %s50
      %s52 = sphi 0, %s50
      %s53 = sphi 0, %s52
      %s67 = sphi 0, %s53
      %s71 = sphi 0, %s71
      %s73 = sphi 0, %s71
      %s74 = sphi 0, %s73
      %s88 = sphi 0, %s74
      %s94 = sphi 0, %s96
      %s97 = sphi 0, %s94
      %s98 = sphi 0, %s97
      %s114 = sphi 0, %s98
    $region4: #{tpu_custom_call.1} parent=1 // loop_header_branch
      %19 = sbr.rel (%p17) target = $region8
    $region5: #{tpu_custom_call.1} parent=1 // loop_body
      %s21 = ssub.s32 %s16, 1
      %s22 = ssub.s32 %s16, 2
      %s23 = sadd.s32 %s16, 1
      %s24 = ssub.s32 %s16, %s23
      %p25 = scmp.eq.s32.totalorder %s24, 0
      %s27 = sadd.s32 %s26, 1
      %s28 = scalar_select %p25, %s26, %s27
      %p31 = pneg %p25
      %p32 = scmp.eq.s32.totalorder %s16, 1
      %p33 = por %p31, %p32
      %p34 = scmp.ne.s32.totalorder %s26, %s29
      %p35 = scmp.eq.s32.totalorder %s16, 0
      %p36 = por %p34, %p35
      %p37 = scmp.ne.s32.totalorder %s26, %s29
      %p38 = scmp.eq.s32.totalorder %s21, 1
      %p39 = por %p37, %p38
      %p40 = scmp.ne.s32.totalorder %s29, %s30
      %p41 = scmp.eq.s32.totalorder %s21, 0
      %p42 = por %p40, %p41
      %p43 = scmp.ne.s32.totalorder %s29, %s30
      %p44 = scmp.eq.s32.totalorder %s22, 1
      %p45 = por %p43, %p44
      %p47 = scmp.ne.s32.totalorder %s30, %s46
      %p48 = scmp.eq.s32.totalorder %s22, 0
      %p49 = por %p47, %p48
      %s51 = sadd.s32 %s50, 1
      %p54 = scmp.eq.s32.totalorder %s16, 1
      %p55 = scmp.ne.s32.totalorder %s50, %s52
      %p56 = scmp.eq.s32.totalorder %s16, 0
      %p57 = por %p55, %p56
      %p58 = scmp.ne.s32.totalorder %s50, %s52
      %p59 = scmp.eq.s32.totalorder %s21, 1
      %p60 = por %p58, %p59
      %p61 = scmp.ne.s32.totalorder %s52, %s53
      %p62 = scmp.eq.s32.totalorder %s21, 0
      %p63 = por %p61, %p62
      %p64 = scmp.ne.s32.totalorder %s52, %s53
      %p65 = scmp.eq.s32.totalorder %s22, 1
      %p66 = por %p64, %p65
      %p68 = scmp.ne.s32.totalorder %s53, %s67
      %p69 = scmp.eq.s32.totalorder %s22, 0
      %p70 = por %p68, %p69
      %s72 = sadd.s32 %s71, 1
      %p75 = scmp.eq.s32.totalorder %s16, 1
      %p76 = scmp.ne.s32.totalorder %s71, %s73
      %p77 = scmp.eq.s32.totalorder %s16, 0
      %p78 = por %p76, %p77
      %p79 = scmp.ne.s32.totalorder %s71, %s73
      %p80 = scmp.eq.s32.totalorder %s21, 1
      %p81 = por %p79, %p80
      %p82 = scmp.ne.s32.totalorder %s73, %s74
      %p83 = scmp.eq.s32.totalorder %s21, 0
      %p84 = por %p82, %p83
      %p85 = scmp.ne.s32.totalorder %s73, %s74
      %p86 = scmp.eq.s32.totalorder %s22, 1
      %p87 = por %p85, %p86
      %p89 = scmp.ne.s32.totalorder %s74, %s88
      %p90 = scmp.eq.s32.totalorder %s22, 0
      %p91 = por %p89, %p90
      %s92 = ssub.s32 %s16, %s23
      %p93 = scmp.eq.s32.totalorder %s92, 0
      %s95 = sadd.s32 %s94, 1
      %s96 = scalar_select %p93, %s94, %s95
      %p99 = pneg %p93
      %p100 = scmp.eq.s32.totalorder %s16, 1
      %p101 = por %p99, %p100
      %p102 = scmp.ne.s32.totalorder %s94, %s97
      %p103 = scmp.eq.s32.totalorder %s16, 0
      %p104 = por %p102, %p103
      %p105 = scmp.ne.s32.totalorder %s94, %s97
      %p106 = scmp.eq.s32.totalorder %s21, 1
      %p107 = por %p105, %p106
      %p108 = scmp.ne.s32.totalorder %s97, %s98
      %p109 = scmp.eq.s32.totalorder %s21, 0
      %p110 = por %p108, %p109
      %p111 = scmp.ne.s32.totalorder %s97, %s98
      %p112 = scmp.eq.s32.totalorder %s22, 1
      %p113 = por %p111, %p112
      %p115 = scmp.ne.s32.totalorder %s98, %s114
      %p116 = scmp.eq.s32.totalorder %s22, 0
      %p117 = por %p115, %p116
      %p118 = scmp.le.s32.totalorder 1, %s16
      %p119 = scmp.lt.s32.totalorder %s16, 3
      %p120 = pnand %p118, %p119
      %p121 = pneg %p120
      // Predicated region
      $region9: #{tpu_custom_call.1} parent=5 // pred_check
        _
      $region10: #{tpu_custom_call.1} parent=5 // pred_check_branch
        %123 = sbr.rel (%p120) target = $region12
      $region11: #{tpu_custom_call.1} parent=5 // pred_region
        %s124 = ssub.s32 %s16, 1
        // Predicated region
        $region13: #{tpu_custom_call.1} parent=11 // pred_check
          %p125 = pneg %p63
        $region14: #{tpu_custom_call.1} parent=11 // pred_check_branch
          %127 = sbr.rel (%p125) target = $region16
        $region15: #{tpu_custom_call.1} parent=11 // pred_region
          %s129 = ssub.s32 2048, 2048
          %130 = vsyncadd [#allocation6], %s129
          %s131 = sshll.u32 [#allocation5], 4
          %s132 = int_to_ptr.vmem [resolvable:$true] %s131
          %137 = dma.hbm_to_vmem [thread:$0]  %s1, 2048, %s132, [#allocation6], 128, 128, 8
        $region16: #{tpu_custom_call.1} parent=11 // pred_fallthru
          _
        // Predicated region
        $region17: #{tpu_custom_call.1} parent=11 // pred_check
          %p138 = pneg %p84
        $region18: #{tpu_custom_call.1} parent=11 // pred_check_branch
          %140 = sbr.rel (%p138) target = $region20
        $region19: #{tpu_custom_call.1} parent=11 // pred_region
          _
        $region20: #{tpu_custom_call.1} parent=11 // pred_fallthru
          _
      $region12: #{tpu_custom_call.1} parent=5 // pred_fallthru
        _
      %p141 = scmp.lt.s32.totalorder %s16, 2
      // Predicated region
      $region21: #{tpu_custom_call.1} parent=5 // pred_check
        %p142 = pneg %p141
      $region22: #{tpu_custom_call.1} parent=5 // pred_check_branch
        %144 = sbr.rel (%p142) target = $region24
      $region23: #{tpu_custom_call.1} parent=5 // pred_region
        // Predicated region
        $region25: #{tpu_custom_call.1} parent=23 // pred_check
          %p145 = pneg %p36
        $region26: #{tpu_custom_call.1} parent=23 // pred_check_branch
          %147 = sbr.rel (%p145) target = $region28
        $region27: #{tpu_custom_call.1} parent=23 // pred_region
          %s148 = sand.u32 %s26, 1
          %s149 = scalar_lea.sflag [#allocation3], %s148
          %s150 = sand.u32 %s26, 1
          %s151 = smul.addr %s150, 16
          %s152 = scalar_lea.vmem [#allocation2], %s151
          %s153 = smul.u32 2, %s16
          %s155 = ssub.s32 256, 256
          %156 = vsyncadd %s149, %s155
          %s157 = smul.addr %s153, 128
          %s158 = scalar_lea.hbm %s0, %s157
          %s159 = sshll.u32 %s152, 4
          %s160 = int_to_ptr.vmem [resolvable:$true] %s159
          %165 = dma.hbm_to_vmem [thread:$0]  %s158, 256, %s160, %s149, 128, 128, 8
        $region28: #{tpu_custom_call.1} parent=23 // pred_fallthru
          _
      $region24: #{tpu_custom_call.1} parent=5 // pred_fallthru
        _
      %p166 = scmp.le.s32.totalorder 1, %s16
      %p167 = scmp.lt.s32.totalorder %s16, 3
      %p168 = pnand %p166, %p167
      %p169 = pneg %p168
      // Predicated region
      $region29: #{tpu_custom_call.1} parent=5 // pred_check
        _
      $region30: #{tpu_custom_call.1} parent=5 // pred_check_branch
        %171 = sbr.rel (%p168) target = $region32
      $region31: #{tpu_custom_call.1} parent=5 // pred_region
        %s172 = ssub.s32 %s16, 1
        %s173 = sand.u32 %s29, 1
        %s174 = scalar_lea.sflag [#allocation3], %s173
        %s175 = sand.u32 %s29, 1
        %s176 = smul.addr %s175, 16
        %s177 = scalar_lea.vmem [#allocation2], %s176
        // Predicated region
        $region33: #{tpu_custom_call.1} parent=31 // pred_check
          %p178 = pneg %p42
        $region34: #{tpu_custom_call.1} parent=31 // pred_check_branch
          %180 = sbr.rel (%p178) target = $region36
        $region35: #{tpu_custom_call.1} parent=31 // pred_region
          %181 = dma.done %s174, 256
        $region36: #{tpu_custom_call.1} parent=31 // pred_fallthru
          _
        // Predicated region
        $region37: #{tpu_custom_call.1} parent=31 // pred_check
          %p182 = pneg %p63
        $region38: #{tpu_custom_call.1} parent=31 // pred_check_branch
          %184 = sbr.rel (%p182) target = $region40
        $region39: #{tpu_custom_call.1} parent=31 // pred_region
          %185 = dma.done [#allocation6], 2048
        $region40: #{tpu_custom_call.1} parent=31 // pred_fallthru
          _
        %s186 = sand.u32 %s29, 1
        %s187 = scalar_lea.sflag [#allocation3], %s186
        %s188 = sand.u32 %s29, 1
        %s189 = smul.addr %s188, 16
        %s190 = scalar_lea.vmem [#allocation2], %s189
        %p191 = pneg %p42
        %p192 = pneg %p39
        %p193 = pneg %p63
        %p194 = pneg %p60
        %p195 = pneg %p84
        %p196 = pneg %p81
        %p197 = pneg %p110
        %p198 = pneg %p107
        %s199 = sand.u32 %s97, 1
        %s200 = scalar_lea.sflag [#allocation4], %s199
        %s201 = sand.u32 %s97, 1
        %s202 = smul.addr %s201, 16
        %s203 = scalar_lea.vmem [#allocation7], %s202
        %s204 = smul.u32 2, %s21
        %s205 = smul.u32 2, %s21
        %v206 = vld [vmem:[%s177] sm:$0xff]
        %v207 = vld [vmem:[%s177 + $0x8] sm:$0xff]
        %v208 = vld [vmem:[#allocation5] sm:$0xff]
        %v209 = vld [vmem:[#allocation5 + $0x8] sm:$0xff]
        %v210 = vld [vmem:[#allocation5 + $0x10] sm:$0xff]
        %v211 = vld [vmem:[#allocation5 + $0x18] sm:$0xff]
        %v212 = vld [vmem:[#allocation5 + $0x20] sm:$0xff]
        %v213 = vld [vmem:[#allocation5 + $0x28] sm:$0xff]
        %v214 = vld [vmem:[#allocation5 + $0x30] sm:$0xff]
        %v215 = vld [vmem:[#allocation5 + $0x38] sm:$0xff]
        %v216 = vld [vmem:[#allocation5 + $0x40] sm:$0xff]
        %v217 = vld [vmem:[#allocation5 + $0x48] sm:$0xff]
        %v218 = vld [vmem:[#allocation5 + $0x50] sm:$0xff]
        %v219 = vld [vmem:[#allocation5 + $0x58] sm:$0xff]
        %v220 = vld [vmem:[#allocation5 + $0x60] sm:$0xff]
        %v221 = vld [vmem:[#allocation5 + $0x68] sm:$0xff]
        %v222 = vld [vmem:[#allocation5 + $0x70] sm:$0xff]
        %v223 = vld [vmem:[#allocation5 + $0x78] sm:$0xff]
        %v224 = vld [vmem:[%s2] sm:$0x1]
        %v226 = vlaneseq
        %v227 = vshrl.u32 %v226, 7
        %v228 = vsub.s32 0, %v227
        %v229 = vrot.slane %v224, %v228
        %231 = vmatprep.subr.mxu0 0.0
        %232 = vmatpush1.msra.mxu0 %v208
        %233 = vmatprep.subr.mxu0 0.0
        %234 = vmatpush1.msra.mxu0 %v209
        %235 = vmatprep.subr.mxu0 0.0
        %236 = vmatpush1.msra.mxu0 %v210
        %237 = vmatprep.subr.mxu0 0.0
        %238 = vmatpush1.msra.mxu0 %v211
        %239 = vmatprep.subr.mxu0 0.0
        %240 = vmatpush1.msra.mxu0 %v212
        %241 = vmatprep.subr.mxu0 0.0
        %242 = vmatpush1.msra.mxu0 %v213
        %243 = vmatprep.subr.mxu0 0.0
        %244 = vmatpush1.msra.mxu0 %v214
        %245 = vmatprep.subr.mxu0 0.0
        %246 = vmatpush1.msra.mxu0 %v215
        %247 = vmatprep.subr.mxu0 0.0
        %248 = vmatpush1.msra.mxu0 %v216
        %249 = vmatprep.subr.mxu0 0.0
        %250 = vmatpush1.msra.mxu0 %v217
        %251 = vmatprep.subr.mxu0 0.0
        %252 = vmatpush1.msra.mxu0 %v218
        %253 = vmatprep.subr.mxu0 0.0
        %254 = vmatpush1.msra.mxu0 %v219
        %255 = vmatprep.subr.mxu0 0.0
        %256 = vmatpush1.msra.mxu0 %v220
        %257 = vmatprep.subr.mxu0 0.0
        %258 = vmatpush1.msra.mxu0 %v221
        %259 = vmatprep.subr.mxu0 0.0
        %260 = vmatpush1.msra.mxu0 %v222
        %261 = vmatprep.subr.mxu0 0.0
        %262 = vmatpush1.msra.mxu0 %v223
        %263 = vmatprep.subr.mxu0 0.0
        %264 = vmatpush1.msra.mxu0 0.0
        %265 = vmatprep.subr.mxu0 0.0
        %266 = vmatpush1.msra.mxu0 0.0
        %267 = vmatprep.subr.mxu0 0.0
        %268 = vmatpush1.msra.mxu0 0.0
        %269 = vmatprep.subr.mxu0 0.0
        %270 = vmatpush1.msra.mxu0 0.0
        %271 = vmatprep.subr.mxu0 0.0
        %272 = vmatpush1.msra.mxu0 0.0
        %273 = vmatprep.subr.mxu0 0.0
        %274 = vmatpush1.msra.mxu0 0.0
        %275 = vmatprep.subr.mxu0 0.0
        %276 = vmatpush1.msra.mxu0 0.0
        %277 = vmatprep.subr.mxu0 0.0
        %278 = vmatpush1.msra.mxu0 0.0
        %279 = vmatprep.subr.mxu0 0.0
        %280 = vmatpush1.msra.mxu0 0.0
        %281 = vmatprep.subr.mxu0 0.0
        %282 = vmatpush1.msra.mxu0 0.0
        %283 = vmatprep.subr.mxu0 0.0
        %284 = vmatpush1.msra.mxu0 0.0
        %285 = vmatprep.subr.mxu0 0.0
        %286 = vmatpush1.msra.mxu0 0.0
        %287 = vmatprep.subr.mxu0 0.0
        %288 = vmatpush1.msra.mxu0 0.0
        %289 = vmatprep.subr.mxu0 0.0
        %290 = vmatpush1.msra.mxu0 0.0
        %291 = vmatprep.subr.mxu0 0.0
        %292 = vmatpush1.msra.mxu0 0.0
        %293 = vmatprep.subr.mxu0 0.0
        %294 = vmatpush1.msra.mxu0 0.0
        %295 = vmatprep.mubr.f32.mxu0 0.0
        %296 = vmatmul.mubr.f32.gmra.mrb[0].mxu0 %v206
        %v297 = vpop.f32.mrb[0].mxu0
        %v298 = vadd.f32 %v229, %v297
        %v299 = vpop.f32.mrb[0].mxu0
        %300 = vmatprep.mubr.f32.mxu0 0.0
        %301 = vmatmul.mubr.f32.gmra.mrb[0].mxu0 %v207
        %v302 = vpop.f32.mrb[0].mxu0
        %v303 = vadd.f32 %v229, %v302
        %v304 = vpop.f32.mrb[0].mxu0
        %305 = vdwg.mxu0
        %306 = vst [vmem:[%s203] sm:$0xff] %v298
        %307 = vst [vmem:[%s203 + $0x8] sm:$0xff] %v303
        %s308 = sand.u32 %s97, 1
        %s309 = scalar_lea.sflag [#allocation4], %s308
        %s310 = sand.u32 %s97, 1
        %s311 = smul.addr %s310, 16
        %s312 = scalar_lea.vmem [#allocation7], %s311
        // Predicated region
        $region41: #{tpu_custom_call.1} parent=31 // pred_check
          %p313 = pneg %p107
        $region42: #{tpu_custom_call.1} parent=31 // pred_check_branch
          %315 = sbr.rel (%p313) target = $region44
        $region43: #{tpu_custom_call.1} parent=31 // pred_region
          %s316 = smul.u32 2, %s21
          %s318 = ssub.s32 256, 256
          %319 = vsyncadd %s309, %s318
          %s320 = smul.addr %s316, 128
          %s321 = scalar_lea.hbm %s3, %s320
          %s322 = sshll.u32 %s312, 4
          %s323 = int_to_ptr.vmem [resolvable:$true] %s322
          %328 = dma.vmem_to_hbm [thread:$0]  %s323, 256, %s321, %s309, 128, 128, 8
        $region44: #{tpu_custom_call.1} parent=31 // pred_fallthru
          _
      $region32: #{tpu_custom_call.1} parent=5 // pred_fallthru
        _
      %p329 = scmp.le.s32.totalorder 2, %s16
      // Predicated region
      $region45: #{tpu_custom_call.1} parent=5 // pred_check
        %p330 = pneg %p329
      $region46: #{tpu_custom_call.1} parent=5 // pred_check_branch
        %332 = sbr.rel (%p330) target = $region48
      $region47: #{tpu_custom_call.1} parent=5 // pred_region
        %s333 = ssub.s32 %s16, 2
        // Predicated region
        $region49: #{tpu_custom_call.1} parent=47 // pred_check
          %p334 = pneg %p113
        $region50: #{tpu_custom_call.1} parent=47 // pred_check_branch
          %336 = sbr.rel (%p334) target = $region52
        $region51: #{tpu_custom_call.1} parent=47 // pred_region
          %s337 = sand.u32 %s98, 1
          %s338 = scalar_lea.sflag [#allocation4], %s337
          %s339 = sand.u32 %s98, 1
          %s340 = smul.addr %s339, 16
          %s341 = scalar_lea.vmem [#allocation7], %s340
          %342 = dma.done %s338, 256
        $region52: #{tpu_custom_call.1} parent=47 // pred_fallthru
          _
      $region48: #{tpu_custom_call.1} parent=5 // pred_fallthru
        _
    $region6: #{tpu_custom_call.1} parent=1 // loop_footer
      %s20 = sadd.s32 1, %s16
    $region7: #{tpu_custom_call.1} parent=1 // loop_footer_branch
      %15 = sbr.rel target = $region3
    $region8: #{tpu_custom_call.1} parent=1 // loop_exit
      _
    %343 = vsyncpa [#allocation3], 1
    %s344 = scalar_lea.sflag [#allocation3], 1
    %345 = vsyncpa %s344, 1
    %346 = vsyncpa [#allocation6], 1
    %347 = vsyncpa [#allocation4], 1
    %s348 = scalar_lea.sflag [#allocation4], 1
    %349 = vsyncpa %s348, 1

</llo_original>
